<compile_context>
chip_gen: v6e
topology: v6e:2x2x1
jax: 0.10.0
libtpu: 0.0.40
codegen_flags: <defaults>
</compile_context>

<pallas_src>
import functools
import math

import jax
import jax.numpy as jnp
from jax.experimental import pallas as pl
from jax.experimental.pallas import tpu as pltpu


def _rnn_cell_kernel(xh_ref, w_ref, b_ref, out_ref, *, activation):
    # Single fused MXU matmul with f32 accumulation, then bias + activation
    # in f32, cast once on the way out.
    acc = jnp.dot(xh_ref[...], w_ref[...], preferred_element_type=jnp.float32)
    acc = acc + b_ref[...].astype(jnp.float32)   # (1, tn) broadcasts over batch
    out_ref[...] = activation(acc).astype(out_ref.dtype)


def prepare_rnn_cell_params(weight_ih, weight_hh, bias_ih=None, bias_hh=None,
                            dtype=None):
    """One-time parameter prep — call once, NOT per step.

    Converts PyTorch-layout parameters into the fused kernel layout:
      w_fused: (input_size + hidden_size, hidden_size) == [W_ih^T ; W_hh^T]
      b_fused: (1, hidden_size)                        == bias_ih + bias_hh
    `dtype=jnp.bfloat16` stores the fused weight in bf16 for v6e/v7x MXU speed
    (accumulation inside the kernel stays f32).
    """
    hidden_size = weight_ih.shape[0]
    w_fused = jnp.concatenate([weight_ih.T, weight_hh.T], axis=0)
    if dtype is not None:
        w_fused = w_fused.astype(dtype)
    if bias_ih is None:
        b_fused = jnp.zeros((1, hidden_size), jnp.float32)
    else:
        b_fused = (bias_ih.astype(jnp.float32)
                   + bias_hh.astype(jnp.float32)).reshape(1, hidden_size)
    return w_fused, b_fused


def rnn_cell_forward(x, hx, w_fused, b_fused, *, nonlinearity="tanh",
                     block_m=None, block_n=None):
    """Pallas RNNCell forward with pre-fused parameters.

    Args:
      x:        (batch, input_size)
      hx:       (batch, hidden_size)
      w_fused:  (input_size + hidden_size, hidden_size)  from prepare_rnn_cell_params
      b_fused:  (1, hidden_size)                         from prepare_rnn_cell_params
    Returns:
      h': (batch, hidden_size), dtype of x.
    """
    batch, input_size = x.shape
    hidden_size = hx.shape[-1]
    k = input_size + hidden_size
    assert w_fused.shape == (k, hidden_size), w_fused.shape
    assert b_fused.shape == (1, hidden_size), b_fused.shape

    if nonlinearity == "tanh":
        activation = jnp.tanh
        transcendentals = batch * hidden_size
    elif nonlinearity == "relu":
        activation = lambda v: jnp.maximum(v, 0.0)
        transcendentals = 0
    else:
        raise ValueError(f"Unknown nonlinearity: {nonlinearity}")

    # Activation concat is tiny compared with the weights (which are pre-fused
    # once); it feeds the single fused K = input_size + hidden_size matmul.
    compute_dtype = w_fused.dtype
    xh = jnp.concatenate([x.astype(compute_dtype), hx.astype(compute_dtype)],
                         axis=1)

    # Tile sizes: single block for small problems, 8/128-granular tiles for
    # large ones (128-granular N suits v5e's 4x128x128 MXU; still fine on
    # v6e/v7x 256x256).
    if block_m is None:
        block_m = batch if batch <= 256 else 256
    if block_n is None:
        block_n = hidden_size if hidden_size <= 512 else 256

    grid = (pl.cdiv(batch, block_m), pl.cdiv(hidden_size, block_n))

    # Raise the scoped-VMEM limit only when a block's (double-buffered)
    # working set is large; cap well under v7x's 64 MiB physical VMEM.
    block_bytes = (block_m * k + k * block_n + block_n + block_m * block_n) * 4
    vmem_limit = None
    if block_bytes > 8 * 1024 * 1024:
        vmem_limit = int(min(4 * block_bytes, 56 * 1024 * 1024))

    bytes_accessed = (xh.size * xh.dtype.itemsize
                      + w_fused.size * w_fused.dtype.itemsize
                      + b_fused.size * b_fused.dtype.itemsize
                      + batch * hidden_size * x.dtype.itemsize)
    cost = pl.CostEstimate(
        flops=2 * batch * k * hidden_size,
        transcendentals=transcendentals,
        bytes_accessed=bytes_accessed,
    )

    kernel = pl.pallas_call(
        functools.partial(_rnn_cell_kernel, activation=activation),
        out_shape=jax.ShapeDtypeStruct((batch, hidden_size), x.dtype),
        grid=grid,
        in_specs=[
            pl.BlockSpec((block_m, k), lambda i, j: (i, 0)),   # [x | h] tile
            pl.BlockSpec((k, block_n), lambda i, j: (0, j)),   # fused weight cols
            pl.BlockSpec((1, block_n), lambda i, j: (0, j)),   # fused bias cols
        ],
        out_specs=pl.BlockSpec((block_m, block_n), lambda i, j: (i, j)),
        compiler_params=pltpu.CompilerParams(
            dimension_semantics=("parallel", "parallel"),
            vmem_limit_bytes=vmem_limit,
        ),
        cost_estimate=cost,
    )
    return kernel(xh, w_fused, b_fused)


def rnn_cell_forward_torch_layout(x, hx, weight_ih, weight_hh,
                                  bias_ih=None, bias_hh=None,
                                  nonlinearity="tanh"):
    """Convenience wrapper accepting PyTorch-layout parameters.

    For repeated (per-timestep) calls, call prepare_rnn_cell_params once and
    use rnn_cell_forward directly instead.
    """
    w_fused, b_fused = prepare_rnn_cell_params(weight_ih, weight_hh,
                                               bias_ih, bias_hh)
    return rnn_cell_forward(x, hx, w_fused, b_fused, nonlinearity=nonlinearity)


def init_rnn_cell_params(key, input_size, hidden_size, dtype=jnp.float32):
    """Mirrors RNNCell.reset_parameters(): U(-1/sqrt(H), 1/sqrt(H))."""
    stdv = 1.0 / math.sqrt(hidden_size)
    k1, k2, k3, k4 = jax.random.split(key, 4)
    weight_ih = jax.random.uniform(k1, (hidden_size, input_size), dtype,
                                   minval=-stdv, maxval=stdv)
    weight_hh = jax.random.uniform(k2, (hidden_size, hidden_size), dtype,
                                   minval=-stdv, maxval=stdv)
    bias_ih = jax.random.uniform(k3, (hidden_size,), dtype,
                                 minval=-stdv, maxval=stdv)
    bias_hh = jax.random.uniform(k4, (hidden_size,), dtype,
                                 minval=-stdv, maxval=stdv)
    return weight_ih, weight_hh, bias_ih, bias_hh


if __name__ == "__main__":
    key = jax.random.PRNGKey(0)
    kx, kh, kp = jax.random.split(key, 3)

    # Lane-dense hidden (128) and sublane-aligned batch (8), per perf review.
    batch, input_size, hidden_size = 8, 16, 128

    x = jax.random.normal(kx, (batch, input_size), jnp.float32)
    hx = jax.random.normal(kh, (batch, hidden_size), jnp.float32)
    weight_ih, weight_hh, bias_ih, bias_hh = init_rnn_cell_params(
        kp, input_size, hidden_size)

    # Fuse/transposed parameters ONCE, outside the hot path.
    w_fused, b_fused = prepare_rnn_cell_params(weight_ih, weight_hh,
                                               bias_ih, bias_hh)

    fwd = jax.jit(functools.partial(rnn_cell_forward, nonlinearity="tanh"))
    h_next = jax.block_until_ready(fwd(x, hx, w_fused, b_fused))

    # Pure-JAX reference (PyTorch semantics).
    pre = x @ weight_ih.T + bias_ih + hx @ weight_hh.T + bias_hh
    ref_tanh = jnp.tanh(pre)
    assert h_next.shape == (batch, hidden_size)
    assert jnp.allclose(h_next, ref_tanh, atol=1e-5, rtol=1e-5)

    # ReLU variant of the cell.
    h_relu = jax.block_until_ready(
        rnn_cell_forward(x, hx, w_fused, b_fused, nonlinearity="relu"))
    assert jnp.allclose(h_relu, jnp.maximum(pre, 0.0), atol=1e-5, rtol=1e-5)

    print("KERNEL_OK")
</pallas_src>

<mosaic_0001>
module attributes {stable_mosaic.version = 11 : i64} {
  func.func @_rnn_cell_kernel(%arg0: i32, %arg1: i32, %arg2: memref<8x144xf32, #tpu.memory_space<vmem>>, %arg3: memref<144x128xf32, #tpu.memory_space<vmem>>, %arg4: memref<1x128xf32, #tpu.memory_space<vmem>>, %arg5: memref<8x128xf32, #tpu.memory_space<vmem>>) attributes {dimension_semantics = [#tpu.dimension_semantics<parallel>, #tpu.dimension_semantics<parallel>], iteration_bounds = array<i64: 1, 1>, scalar_prefetch = 0 : i64, scratch_operands = 0 : i64, tpu.core_type = #tpu.core_type<tc>, window_params = [{transform_indices = @transform_0, window_bounds = array<i64: 8, 144>}, {transform_indices = @transform_1, window_bounds = array<i64: 144, 128>}, {transform_indices = @transform_2, window_bounds = array<i64: 1, 128>}, {transform_indices = @transform_3, window_bounds = array<i64: 8, 128>}]} {
    %c0 = arith.constant 0 : index
    %c0_0 = arith.constant 0 : index
    %0 = vector.load %arg2[%c0, %c0_0] : memref<8x144xf32, #tpu.memory_space<vmem>>, vector<8x144xf32>
    %c0_1 = arith.constant 0 : index
    %c0_2 = arith.constant 0 : index
    %1 = vector.load %arg3[%c0_1, %c0_2] : memref<144x128xf32, #tpu.memory_space<vmem>>, vector<144x128xf32>
    %cst = arith.constant dense<0.000000e+00> : vector<8x128xf32>
    %2 = tpu.matmul %0, %1, %cst {dimension_numbers = #tpu.dot_dimension_numbers<[1], [0], [0], [1], [0, 0, 1, 1], [], []>} : vector<8x144xf32>, vector<144x128xf32>, vector<8x128xf32> -> vector<8x128xf32>
    %c0_3 = arith.constant 0 : index
    %c0_4 = arith.constant 0 : index
    %3 = vector.load %arg4[%c0_3, %c0_4] : memref<1x128xf32, #tpu.memory_space<vmem>>, vector<1x128xf32>
    %4 = vector.broadcast %3 : vector<1x128xf32> to vector<8x128xf32>
    %5 = arith.addf %2, %4 : vector<8x128xf32>
    %6 = math.tanh %5 : vector<8x128xf32>
    %c0_5 = arith.constant 0 : index
    %c0_6 = arith.constant 0 : index
    %7 = vector.load %arg5[%c0_5, %c0_6] : memref<8x128xf32, #tpu.memory_space<vmem>>, vector<8x128xf32>
    tpu.vector_store %arg5[%c0_5, %c0_6], %6 {strides = array<i32>} : memref<8x128xf32, #tpu.memory_space<vmem>>, vector<8x128xf32>,
    return
  }
  func.func @transform_0(%arg0: i32, %arg1: i32) -> (i32, i32) {
    %c0_i32 = arith.constant 0 : i32
    %c0_i32_0 = arith.constant 0 : i32
    return %arg0, %c0_i32 : i32, i32
  }
  func.func @transform_1(%arg0: i32, %arg1: i32) -> (i32, i32) {
    %c0_i32 = arith.constant 0 : i32
    %c0_i32_0 = arith.constant 0 : i32
    return %c0_i32, %arg1 : i32, i32
  }
  func.func @transform_2(%arg0: i32, %arg1: i32) -> (i32, i32) {
    %c0_i32 = arith.constant 0 : i32
    %c0_i32_0 = arith.constant 0 : i32
    return %c0_i32, %arg1 : i32, i32
  }
  func.func @transform_3(%arg0: i32, %arg1: i32) -> (i32, i32) {
    %c0_i32 = arith.constant 0 : i32
    return %arg0, %arg1 : i32, i32
  }
}

</mosaic_0001>

<llo_original>
// kernel: rnn_cell_forward.1
$region0: #{rnn_cell_forward.1}
  #allocation0 [shape = 'u32[]', space=smem, size = 0x4, offset = 0x4, fixed_abs, tag = 'smem constant byte address 0x4 - core index']
  #allocation1 [shape = 'u32[144,128]{1,0:T(1,128)}', space=vmem, size = 0x12000, scoped, tag = 'internal scratch']
  %s0 = inlined_call_operand.vmem [shape: f32[8,144], index: 0, kind: input, shape index: {}]
  %s1 = inlined_call_operand.hbm [shape: f32[144,128], index: 1, kind: input, shape index: {}]
  %s2 = inlined_call_operand.vmem [shape: f32[1,128], index: 2, kind: input, shape index: {}]
  %s3 = inlined_call_operand.hbm [shape: f32[8,128], index: 3, kind: output, shape index: {}]
  %s4 = sld [smem:[#allocation0]]
  $region26: #{rnn_cell_forward.1} parent=0
    _
  %s6 = ssub.s32 1, %s4
  %s7 = scalar_select 0, %s6, %s4
  $region1: #{rnn_cell_forward.1} parent=0
    #allocation2 [shape = 'u8[73728]{0}', space=vmem, size = 0x12000, scoped, tag = 'input window, operand 1, single buffered']
    #allocation3 [shape = 's32[1]{0}', space=sflag, size = 0x4, scoped, tag = 'scoped memory for rnn_cell_forward.1']
    #allocation4 [shape = 's32[1]{0}', space=sflag, size = 0x4, scoped, tag = 'scoped memory for rnn_cell_forward.1']
    #allocation5 [shape = 'u8[4096]{0}', space=vmem, size = 0x1000, scoped, tag = 'output window, operand 0, single buffered']
    %8 = vsyncpa [#allocation3], 0
    %9 = vsyncpa [#allocation4], 0
    // Predicated region
    $region2: #{rnn_cell_forward.1} parent=1 // pred_check
      _
    $region3: #{rnn_cell_forward.1} parent=1 // pred_check_branch
      %11 = sbr.rel (0) target = $region5
    $region4: #{rnn_cell_forward.1} parent=1 // pred_region
      _
    $region5: #{rnn_cell_forward.1} parent=1 // pred_fallthru
      _
    // Predicated region
    $region6: #{rnn_cell_forward.1} parent=1 // pred_check
      _
    $region7: #{rnn_cell_forward.1} parent=1 // pred_check_branch
      %13 = sbr.rel (0) target = $region9
    $region8: #{rnn_cell_forward.1} parent=1 // pred_region
      %s15 = ssub.s32 2304, 2304
      %16 = vsyncadd [#allocation3], %s15
      %s17 = sshll.u32 [#allocation2], 4
      %s18 = int_to_ptr.vmem [resolvable:$true] %s17
      %23 = dma.hbm_to_vmem [thread:$0]  %s1, 2304, %s18, [#allocation3], 128, 128, 8
    $region9: #{rnn_cell_forward.1} parent=1 // pred_fallthru
      _
    // Predicated region
    $region10: #{rnn_cell_forward.1} parent=1 // pred_check
      _
    $region11: #{rnn_cell_forward.1} parent=1 // pred_check_branch
      %25 = sbr.rel (0) target = $region13
    $region12: #{rnn_cell_forward.1} parent=1 // pred_region
      _
    $region13: #{rnn_cell_forward.1} parent=1 // pred_fallthru
      _
    // Predicated region
    $region14: #{rnn_cell_forward.1} parent=1 // pred_check
      _
    $region15: #{rnn_cell_forward.1} parent=1 // pred_check_branch
      %27 = sbr.rel (0) target = $region17
    $region16: #{rnn_cell_forward.1} parent=1 // pred_region
      %28 = dma.done [#allocation3], 2304
    $region17: #{rnn_cell_forward.1} parent=1 // pred_fallthru
      _
    %v29 = vld [vmem:[%s0] sm:$0xff]
    %v30 = vld [vmem:[%s0 + $0x8] sm:$0xff]
    %v31 = vld [vmem:[#allocation2] sm:$0xff]
    %v32 = vld [vmem:[#allocation2 + $0x8] sm:$0xff]
    %v33 = vld [vmem:[#allocation2 + $0x10] sm:$0xff]
    %v34 = vld [vmem:[#allocation2 + $0x18] sm:$0xff]
    %v35 = vld [vmem:[#allocation2 + $0x20] sm:$0xff]
    %v36 = vld [vmem:[#allocation2 + $0x28] sm:$0xff]
    %v37 = vld [vmem:[#allocation2 + $0x30] sm:$0xff]
    %v38 = vld [vmem:[#allocation2 + $0x38] sm:$0xff]
    %v39 = vld [vmem:[#allocation2 + $0x40] sm:$0xff]
    %v40 = vld [vmem:[#allocation2 + $0x48] sm:$0xff]
    %v41 = vld [vmem:[#allocation2 + $0x50] sm:$0xff]
    %v42 = vld [vmem:[#allocation2 + $0x58] sm:$0xff]
    %v43 = vld [vmem:[#allocation2 + $0x60] sm:$0xff]
    %v44 = vld [vmem:[#allocation2 + $0x68] sm:$0xff]
    %v45 = vld [vmem:[#allocation2 + $0x70] sm:$0xff]
    %v46 = vld [vmem:[#allocation2 + $0x78] sm:$0xff]
    %v47 = vld [vmem:[#allocation2 + $0x80] sm:$0xff]
    %v48 = vld [vmem:[#allocation2 + $0x88] sm:$0xff]
    %v49 = vld [vmem:[%s2] sm:$0x1]
    %v51 = vlaneseq
    %v52 = vshrl.u32 %v51, 7
    %v53 = vsub.s32 0, %v52
    %v54 = vrot.slane %v49, %v53
    %vm56 = vcmask 130048
    %v58 = vsel %vm56, %v30, 0
    %60 = vmatprep.subr.mxu0 0.0
    %61 = vmatpush1.msra.mxu0 %v46
    %62 = vmatprep.subr.mxu0 0.0
    %63 = vmatpush1.msra.mxu0 %v45
    %64 = vmatprep.subr.mxu0 0.0
    %65 = vmatpush1.msra.mxu0 %v44
    %66 = vmatprep.subr.mxu0 0.0
    %67 = vmatpush1.msra.mxu0 %v43
    %68 = vmatprep.subr.mxu0 0.0
    %69 = vmatpush1.msra.mxu0 %v42
    %70 = vmatprep.subr.mxu0 0.0
    %71 = vmatpush1.msra.mxu0 %v41
    %72 = vmatprep.subr.mxu0 0.0
    %73 = vmatpush1.msra.mxu0 %v40
    %74 = vmatprep.subr.mxu0 0.0
    %75 = vmatpush1.msra.mxu0 %v39
    %76 = vmatprep.subr.mxu0 0.0
    %77 = vmatpush1.msra.mxu0 %v38
    %78 = vmatprep.subr.mxu0 0.0
    %79 = vmatpush1.msra.mxu0 %v37
    %80 = vmatprep.subr.mxu0 0.0
    %81 = vmatpush1.msra.mxu0 %v36
    %82 = vmatprep.subr.mxu0 0.0
    %83 = vmatpush1.msra.mxu0 %v35
    %84 = vmatprep.subr.mxu0 0.0
    %85 = vmatpush1.msra.mxu0 %v34
    %86 = vmatprep.subr.mxu0 0.0
    %87 = vmatpush1.msra.mxu0 %v33
    %88 = vmatprep.subr.mxu0 0.0
    %89 = vmatpush1.msra.mxu0 %v32
    %90 = vmatprep.subr.mxu0 0.0
    %91 = vmatpush1.msra.mxu0 %v31
    %92 = vmatprep.subr.mxu0 0.0
    %93 = vmatpush2.msra.mxu0 0.0
    %94 = vmatprep.subr.mxu0 0.0
    %95 = vmatpush2.msra.mxu0 0.0
    %96 = vmatprep.subr.mxu0 0.0
    %97 = vmatpush2.msra.mxu0 0.0
    %98 = vmatprep.subr.mxu0 0.0
    %99 = vmatpush2.msra.mxu0 0.0
    %100 = vmatprep.subr.mxu0 0.0
    %101 = vmatpush2.msra.mxu0 0.0
    %102 = vmatprep.subr.mxu0 0.0
    %103 = vmatpush2.msra.mxu0 0.0
    %104 = vmatprep.subr.mxu0 0.0
    %105 = vmatpush2.msra.mxu0 0.0
    %106 = vmatprep.subr.mxu0 0.0
    %107 = vmatpush2.msra.mxu0 0.0
    %108 = vmatprep.subr.mxu0 0.0
    %109 = vmatpush2.msra.mxu0 0.0
    %110 = vmatprep.subr.mxu0 0.0
    %111 = vmatpush2.msra.mxu0 0.0
    %112 = vmatprep.subr.mxu0 0.0
    %113 = vmatpush2.msra.mxu0 0.0
    %114 = vmatprep.subr.mxu0 0.0
    %115 = vmatpush2.msra.mxu0 0.0
    %116 = vmatprep.subr.mxu0 0.0
    %117 = vmatpush2.msra.mxu0 0.0
    %118 = vmatprep.subr.mxu0 0.0
    %119 = vmatpush2.msra.mxu0 0.0
    %120 = vmatprep.subr.mxu0 0.0
    %121 = vmatpush2.msra.mxu0 %v48
    %122 = vmatprep.subr.mxu0 0.0
    %123 = vmatpush2.msra.mxu0 %v47
    %124 = vmatprep.mubr.f32.mxu0 %v58
    %125 = vmatmul.mubr.f32.gmra.mxu0 %v29
    %v126 = vpop.f32.mrf.mxu0
    %v127 = vadd.f32 %v54, %v126
    %v128 = vpop.f32.mrf.mxu0
    %129 = vdwg.mxu0
    %v130 = vtanh.pop %v127
    %131 = vst [vmem:[#allocation5] sm:$0xff] %v130
    // Predicated region
    $region18: #{rnn_cell_forward.1} parent=1 // pred_check
      _
    $region19: #{rnn_cell_forward.1} parent=1 // pred_check_branch
      %133 = sbr.rel (0) target = $region21
    $region20: #{rnn_cell_forward.1} parent=1 // pred_region
      %s135 = ssub.s32 128, 128
      %136 = vsyncadd [#allocation4], %s135
      %s138 = sshll.u32 [#allocation5], 4
      %s139 = int_to_ptr.vmem [resolvable:$true] %s138
      %141 = dma.vmem_to_hbm [thread:$0]  %s139, 128, %s3, [#allocation4]
    $region21: #{rnn_cell_forward.1} parent=1 // pred_fallthru
      _
    // Predicated region
    $region22: #{rnn_cell_forward.1} parent=1 // pred_check
      _
    $region23: #{rnn_cell_forward.1} parent=1 // pred_check_branch
      %143 = sbr.rel (0) target = $region25
    $region24: #{rnn_cell_forward.1} parent=1 // pred_region
      %144 = dma.done [#allocation4], 128
    $region25: #{rnn_cell_forward.1} parent=1 // pred_fallthru
      _
    %145 = vsyncpa [#allocation3], 1
    %146 = vsyncpa [#allocation4], 1

</llo_original>
